<compile_context>
chip_gen: v7x
topology: tpu7x:2x2x1
jax: 0.10.0
libtpu: 0.0.40
codegen_flags: <defaults>
</compile_context>

<pallas_src>
import numpy as np

import jax
import jax.numpy as jnp
from jax import lax
from jax.experimental import pallas as pl
from jax.experimental.pallas import tpu as pltpu

_TAPS = ((0, 0), (0, 1), (1, 0), (1, 1))   # conv4 (kh, kw) tap order


def _round_up(x, m):
    return (x + m - 1) // m * m


# ----------------------------- fused Pallas kernel ---------------------------

def _make_kernel(W3, P3p):
    def kernel(xc_ref, wc_ref, w3_ref, w4_ref, b4_ref, msk_ref, o_ref):
        f32 = jnp.float32
        # Stage A: conv1 + conv2 (channel-tiled) + bias + tanh on conv3's grid.
        t = jnp.tanh(jnp.dot(wc_ref[...], xc_ref[...],
                             preferred_element_type=f32))            # (16, P3p)
        # Stage B: conv3 (1x1, no bias) + relu.
        v5 = jnp.maximum(jnp.dot(w3_ref[...], t,
                                 preferred_element_type=f32), 0.0)   # (32, P3p)
        # Stage C: conv4 taps = lane roll (XLU) + 0/1 mask (VPU); stack the four
        # shifted copies along sublanes -> single K=128 MXU matmul.
        parts = []
        for tap, (ta, tb) in enumerate(_TAPS):
            s = (4 * ta - 2) * W3 + (4 * tb - 2)         # source offset col+s
            rolled = pltpu.roll(v5, (-s) % P3p, axis=1)  # rolled[:,c] = v5[:,c+s]
            parts.append(msk_ref[tap] * rolled)          # (1,P3p)*(32,P3p)
        S = jnp.concatenate(parts, axis=0)                            # (128, P3p)
        o_ref[...] = jnp.maximum(
            jnp.dot(w4_ref[...], S, preferred_element_type=f32) + b4_ref[...],
            0.0)
    return kernel


# ------------------------ one-time parameter preparation ---------------------

def prepare_params(p):
    """Hoisted out of the per-call path: build matmul-ready fused weights."""
    f32 = jnp.float32
    w1f = p["w1"].reshape(8, 27)                    # (O, I*KH*KW), I outer
    w2f = p["w2"].reshape(16, 12)
    bc = jnp.concatenate([p["b1"] + p["b2"][:8], p["b1"] + p["b2"][8:]])
    # Wc row c = [w1[c%8] | w2[c] | b1[c%8]+b2[c]]  -> (16, 27+12+1 = 40)
    wc = jnp.concatenate([jnp.concatenate([w1f, w1f], axis=0), w2f, bc[:, None]],
                         axis=1)
    w3m = p["w3"].reshape(32, 16)
    # conv4: block-diagonal (groups=2) weights for all 4 taps, stacked -> (64,128)
    z = jnp.zeros((32, 16), f32)
    blocks = []
    for (ta, tb) in _TAPS:
        top = jnp.concatenate([p["w4"][:32, :, ta, tb], z], axis=1)   # group 0
        bot = jnp.concatenate([z, p["w4"][32:, :, ta, tb]], axis=1)   # group 1
        blocks.append(jnp.concatenate([top, bot], axis=0))            # (64, 32)
    w4w = jnp.concatenate(blocks, axis=1)                             # (64, 128)
    return dict(wc=wc, w3=w3m, w4w=w4w, b4=p["b4"].reshape(64, 1))


# ------------------------------ forward (per call) ----------------------------

def model_forward(x, prep):
    N, C_in, H, W = x.shape
    assert N == 1 and C_in == 3
    # TODO(synk): for v7x throughput, batch images along a "parallel" grid axis
    # (2nd TensorCore) or lane-batch columns; out of scope for this N==1 kernel.
    H2, W2 = (H - 2) // 2 + 1, (W - 2) // 2 + 1       # conv2 grid (= cropped v1)
    H3, W3 = (H2 + 3) // 2 + 1, (W2 + 3) // 2 + 1     # conv3 / conv4 grid
    P3 = H3 * W3
    P3p = _round_up(P3, 128)
    nj, ni = (H2 + 1) // 2, (W2 + 1) // 2             # conv3 columns with real data

    # ---- per-call input prep: im2col sampled directly on conv3's output grid.
    # conv3 output (j,i) reads v3 at (2j-2, 2i-2); valid j,i are 1..nj / 1..ni.
    xp = jnp.pad(x[0], ((0, 0), (2, 2), (2, 2)))      # conv1's padded coords

    def patches(taps):
        sls = [xp[:, ro: ro + 4 * (nj - 1) + 1: 4, co: co + 4 * (ni - 1) + 1: 4]
               for (ro, co) in taps]                  # each (3, nj, ni)
        return jnp.stack(sls, axis=1).reshape(3 * len(taps), nj, ni)

    x1 = patches([(kh, kw) for kh in range(3) for kw in range(3)])            # conv1
    x2 = patches([(1 + 3 * kh, 1 + 3 * kw) for kh in range(2) for kw in range(2)])  # conv2
    ones = jnp.ones((1, nj, ni), jnp.float32)         # bias row == validity mask
    xc = jnp.concatenate([x1, x2, ones], axis=0)      # (40, nj, ni)
    xc = jnp.pad(xc, ((0, 0), (1, H3 - 1 - nj), (1, W3 - 1 - ni)))  # (40, H3, W3)
    xc = jnp.pad(xc.reshape(40, P3), ((0, 0), (0, P3p - P3)))       # (40, P3p)

    # conv4 per-tap boundary masks (static shape -> baked as an HLO constant).
    msk = np.zeros((4, 1, P3p), np.float32)
    for t_i, (ta, tb) in enumerate(_TAPS):
        for col in range(P3):
            j, i = divmod(col, W3)
            if 0 <= j + 4 * ta - 2 < H3 and 0 <= i + 4 * tb - 2 < W3:
                msk[t_i, 0, col] = 1.0
    msk = jnp.asarray(msk)

    flops = 2 * (16 * 40 * P3p + 32 * 16 * P3p + 64 * 128 * P3p)
    bytes_accessed = 4 * (40 * P3p + 16 * 40 + 32 * 16 + 64 * 128 + 64
                          + 4 * P3p + 64 * P3p)

    vmem = pl.BlockSpec(memory_space=pltpu.MemorySpace.VMEM)
    out = pl.pallas_call(
        _make_kernel(W3, P3p),
        out_shape=jax.ShapeDtypeStruct((64, P3p), jnp.float32),
        in_specs=[vmem] * 6,
        out_specs=vmem,
        cost_estimate=pl.CostEstimate(flops=flops, transcendentals=16 * P3p,
                                      bytes_accessed=bytes_accessed),
    )(xc, prep["wc"], prep["w3"], prep["w4w"], prep["b4"], msk)

    # single crop + reshape to NCHW at the very end (lane-dense until here)
    return out[:, :P3].reshape(1, 64, H3, W3)


# --------------------------------- params ------------------------------------

def init_params(key):
    def uinit(k, shape, fan_in):
        bound = 1.0 / (fan_in ** 0.5)
        return jax.random.uniform(k, shape, jnp.float32, -bound, bound)

    ks = jax.random.split(key, 7)
    return dict(
        w1=uinit(ks[0], (8, 3, 3, 3), 27),   b1=uinit(ks[1], (8,), 27),
        w2=uinit(ks[2], (16, 3, 2, 2), 12),  b2=uinit(ks[3], (16,), 12),
        w3=uinit(ks[4], (32, 16, 1, 1), 16),                       # bias=False
        w4=uinit(ks[5], (64, 16, 2, 2), 64), b4=uinit(ks[6], (64,), 64),
    )


# ---------------------------- plain-JAX reference -----------------------------

def _conv_ref(x, w, b, stride, padding, dilation=1, groups=1, act="none"):
    y = lax.conv_general_dilated(
        x, w, window_strides=(stride, stride),
        padding=((padding, padding), (padding, padding)),
        rhs_dilation=(dilation, dilation),
        dimension_numbers=("NCHW", "OIHW", "NCHW"),
        feature_group_count=groups,
        precision=lax.Precision.HIGHEST)
    if b is not None:
        y = y + b.reshape(1, -1, 1, 1)
    if act == "relu":
        y = jnp.maximum(y, 0.0)
    return y


def model_ref(x, p):
    v1 = _conv_ref(x, p["w1"], p["b1"], 2, 2, 1)
    v2 = _conv_ref(x, p["w2"], p["b2"], 2, 1, 3)
    H2, W2 = v2.shape[2], v2.shape[3]
    v1c = jnp.tile(v1[:, :, :H2, :W2], (1, 2, 1, 1))   # same reconciliation
    v3 = jnp.tanh(v1c + v2)
    v5 = _conv_ref(v3, p["w3"], None, 2, 2, 1, act="relu")
    v7 = _conv_ref(v5, p["w4"], p["b4"], 1, 2, 4, groups=2, act="relu")
    return v7


if __name__ == "__main__":
    key = jax.random.PRNGKey(0)
    kx, kp = jax.random.split(key)
    x = jax.random.normal(kx, (1, 3, 32, 32), jnp.float32)   # small NCHW input
    params = init_params(kp)

    prep = prepare_params(params)          # one-time weight prep (hoisted)
    fwd = jax.jit(model_forward)
    out = jax.block_until_ready(fwd(x, prep))
    ref = jax.block_until_ready(model_ref(x, params))

    assert out.shape == (1, 64, 10, 10), out.shape
    err = float(jnp.max(jnp.abs(out - ref)))
    assert jnp.allclose(out, ref, atol=1e-3, rtol=1e-3), err
    print("KERNEL_OK")
</pallas_src>

<mosaic_0001>
module attributes {stable_mosaic.version = 11 : i64} {
  func.func @kernel(%arg0: memref<40x128xf32, #tpu.memory_space<vmem>>, %arg1: memref<16x40xf32, #tpu.memory_space<vmem>>, %arg2: memref<32x16xf32, #tpu.memory_space<vmem>>, %arg3: memref<64x128xf32, #tpu.memory_space<vmem>>, %arg4: memref<64x1xf32, #tpu.memory_space<vmem>>, %arg5: memref<4x1x128xf32, #tpu.memory_space<vmem>>, %arg6: memref<64x128xf32, #tpu.memory_space<vmem>>) attributes {dimension_semantics = [], scalar_prefetch = 0 : i64, scratch_operands = 0 : i64, tpu.core_type = #tpu.core_type<tc>} {
    %c0 = arith.constant 0 : index
    %c0_0 = arith.constant 0 : index
    %0 = vector.load %arg1[%c0, %c0_0] : memref<16x40xf32, #tpu.memory_space<vmem>>, vector<16x40xf32>
    %c0_1 = arith.constant 0 : index
    %c0_2 = arith.constant 0 : index
    %1 = vector.load %arg0[%c0_1, %c0_2] : memref<40x128xf32, #tpu.memory_space<vmem>>, vector<40x128xf32>
    %cst = arith.constant dense<0.000000e+00> : vector<16x128xf32>
    %2 = tpu.matmul %0, %1, %cst {dimension_numbers = #tpu.dot_dimension_numbers<[1], [0], [0], [1], [0, 0, 1, 1], [], []>} : vector<16x40xf32>, vector<40x128xf32>, vector<16x128xf32> -> vector<16x128xf32>
    %3 = math.tanh %2 : vector<16x128xf32>
    %c0_3 = arith.constant 0 : index
    %c0_4 = arith.constant 0 : index
    %4 = vector.load %arg2[%c0_3, %c0_4] : memref<32x16xf32, #tpu.memory_space<vmem>>, vector<32x16xf32>
    %cst_5 = arith.constant dense<0.000000e+00> : vector<32x128xf32>
    %5 = tpu.matmul %4, %3, %cst_5 {dimension_numbers = #tpu.dot_dimension_numbers<[1], [0], [0], [1], [0, 0, 1, 1], [], []>} : vector<32x16xf32>, vector<16x128xf32>, vector<32x128xf32> -> vector<32x128xf32>
    %cst_6 = arith.constant 0.000000e+00 : f32
    %6 = vector.broadcast %cst_6 : f32 to vector<32x128xf32>
    %7 = arith.maximumf %5, %6 : vector<32x128xf32>
    %c22_i32 = arith.constant 22 : i32
    %8 = tpu.dynamic_rotate %7 by %c22_i32 dim 1 : vector<32x128xf32>, i32 -> vector<32x128xf32>
    %c0_7 = arith.constant 0 : index
    %c0_8 = arith.constant 0 : index
    %c0_9 = arith.constant 0 : index
    %9 = vector.load %arg5[%c0_7, %c0_8, %c0_9] : memref<4x1x128xf32, #tpu.memory_space<vmem>>, vector<1x1x128xf32>
    %10 = vector.shape_cast %9 : vector<1x1x128xf32> to vector<1x128xf32>
    %11 = vector.broadcast %10 : vector<1x128xf32> to vector<32x128xf32>
    %12 = arith.mulf %11, %8 : vector<32x128xf32>
    %c18_i32 = arith.constant 18 : i32
    %13 = tpu.dynamic_rotate %7 by %c18_i32 dim 1 : vector<32x128xf32>, i32 -> vector<32x128xf32>
    %c1 = arith.constant 1 : index
    %c0_10 = arith.constant 0 : index
    %c0_11 = arith.constant 0 : index
    %14 = vector.load %arg5[%c1, %c0_10, %c0_11] : memref<4x1x128xf32, #tpu.memory_space<vmem>>, vector<1x1x128xf32>
    %15 = vector.shape_cast %14 : vector<1x1x128xf32> to vector<1x128xf32>
    %16 = vector.broadcast %15 : vector<1x128xf32> to vector<32x128xf32>
    %17 = arith.mulf %16, %13 : vector<32x128xf32>
    %c110_i32 = arith.constant 110 : i32
    %18 = tpu.dynamic_rotate %7 by %c110_i32 dim 1 : vector<32x128xf32>, i32 -> vector<32x128xf32>
    %c2 = arith.constant 2 : index
    %c0_12 = arith.constant 0 : index
    %c0_13 = arith.constant 0 : index
    %19 = vector.load %arg5[%c2, %c0_12, %c0_13] : memref<4x1x128xf32, #tpu.memory_space<vmem>>, vector<1x1x128xf32>
    %20 = vector.shape_cast %19 : vector<1x1x128xf32> to vector<1x128xf32>
    %21 = vector.broadcast %20 : vector<1x128xf32> to vector<32x128xf32>
    %22 = arith.mulf %21, %18 : vector<32x128xf32>
    %c106_i32 = arith.constant 106 : i32
    %23 = tpu.dynamic_rotate %7 by %c106_i32 dim 1 : vector<32x128xf32>, i32 -> vector<32x128xf32>
    %c3 = arith.constant 3 : index
    %c0_14 = arith.constant 0 : index
    %c0_15 = arith.constant 0 : index
    %24 = vector.load %arg5[%c3, %c0_14, %c0_15] : memref<4x1x128xf32, #tpu.memory_space<vmem>>, vector<1x1x128xf32>
    %25 = vector.shape_cast %24 : vector<1x1x128xf32> to vector<1x128xf32>
    %26 = vector.broadcast %25 : vector<1x128xf32> to vector<32x128xf32>
    %27 = arith.mulf %26, %23 : vector<32x128xf32>
    %28 = tpu.concatenate %12, %17, %22, %27 in 0 : vector<32x128xf32>, vector<32x128xf32>, vector<32x128xf32>, vector<32x128xf32> -> vector<128x128xf32>
    %c0_16 = arith.constant 0 : index
    %c0_17 = arith.constant 0 : index
    %29 = vector.load %arg3[%c0_16, %c0_17] : memref<64x128xf32, #tpu.memory_space<vmem>>, vector<64x128xf32>
    %cst_18 = arith.constant dense<0.000000e+00> : vector<64x128xf32>
    %30 = tpu.matmul %29, %28, %cst_18 {dimension_numbers = #tpu.dot_dimension_numbers<[1], [0], [0], [1], [0, 0, 1, 1], [], []>} : vector<64x128xf32>, vector<128x128xf32>, vector<64x128xf32> -> vector<64x128xf32>
    %c0_19 = arith.constant 0 : index
    %c0_20 = arith.constant 0 : index
    %31 = vector.load %arg4[%c0_19, %c0_20] : memref<64x1xf32, #tpu.memory_space<vmem>>, vector<64x1xf32>
    %32 = vector.broadcast %31 : vector<64x1xf32> to vector<64x128xf32>
    %33 = arith.addf %30, %32 : vector<64x128xf32>
    %cst_21 = arith.constant 0.000000e+00 : f32
    %34 = vector.broadcast %cst_21 : f32 to vector<64x128xf32>
    %35 = arith.maximumf %33, %34 : vector<64x128xf32>
    %c0_22 = arith.constant 0 : index
    %c0_23 = arith.constant 0 : index
    %36 = vector.load %arg6[%c0_22, %c0_23] : memref<64x128xf32, #tpu.memory_space<vmem>>, vector<64x128xf32>
    tpu.vector_store %arg6[%c0_22, %c0_23], %35 {strides = array<i32>} : memref<64x128xf32, #tpu.memory_space<vmem>>, vector<64x128xf32>,
    return
  }
}

</mosaic_0001>

<llo_original>
// kernel: model_forward.1
$region0: #{model_forward.1}
  #allocation0 [shape = 'u32[]', space=smem, size = 0x4, offset = 0x4, fixed_abs, tag = 'smem constant byte address 0x4 - core index']
  #allocation1 [shape = 'u32[144,128]{1,0:T(1,128)}', space=vmem, size = 0x12000, scoped, tag = 'internal scratch']
  %s0 = inlined_call_operand.vmem [shape: f32[40,128], index: 0, kind: input, shape index: {}]
  %s1 = inlined_call_operand.vmem [shape: f32[16,40], index: 1, kind: input, shape index: {}]
  %s2 = inlined_call_operand.vmem [shape: f32[32,16], index: 2, kind: input, shape index: {}]
  %s3 = inlined_call_operand.vmem [shape: f32[64,128], index: 3, kind: input, shape index: {}]
  %s4 = inlined_call_operand.vmem [shape: f32[64,1], index: 4, kind: input, shape index: {}]
  %s5 = inlined_call_operand.vmem [shape: f32[4,1,128], index: 5, kind: input, shape index: {}]
  %s6 = inlined_call_operand.vmem [shape: f32[64,128], index: 6, kind: output, shape index: {}]
  %s7 = sld [smem:[#allocation0]]
  $region34: #{model_forward.1} parent=0
    _
  %s9 = ssub.s32 1, %s7
  %s10 = scalar_select 0, %s9, %s7
  // Predicated region
  $region2: #{model_forward.1} parent=0 // pred_check
    _
  $region3: #{model_forward.1} parent=0 // pred_check_branch
    %12 = sbr.rel (0) target = $region5
  $region4: #{model_forward.1} parent=0 // pred_region
    _
  $region5: #{model_forward.1} parent=0 // pred_fallthru
    _
  // Predicated region
  $region6: #{model_forward.1} parent=0 // pred_check
    _
  $region7: #{model_forward.1} parent=0 // pred_check_branch
    %14 = sbr.rel (0) target = $region9
  $region8: #{model_forward.1} parent=0 // pred_region
    _
  $region9: #{model_forward.1} parent=0 // pred_fallthru
    _
  // Predicated region
  $region10: #{model_forward.1} parent=0 // pred_check
    _
  $region11: #{model_forward.1} parent=0 // pred_check_branch
    %16 = sbr.rel (0) target = $region13
  $region12: #{model_forward.1} parent=0 // pred_region
    _
  $region13: #{model_forward.1} parent=0 // pred_fallthru
    _
  // Predicated region
  $region14: #{model_forward.1} parent=0 // pred_check
    _
  $region15: #{model_forward.1} parent=0 // pred_check_branch
    %18 = sbr.rel (0) target = $region17
  $region16: #{model_forward.1} parent=0 // pred_region
    _
  $region17: #{model_forward.1} parent=0 // pred_fallthru
    _
  // Predicated region
  $region18: #{model_forward.1} parent=0 // pred_check
    _
  $region19: #{model_forward.1} parent=0 // pred_check_branch
    %20 = sbr.rel (0) target = $region21
  $region20: #{model_forward.1} parent=0 // pred_region
    _
  $region21: #{model_forward.1} parent=0 // pred_fallthru
    _
  // Predicated region
  $region22: #{model_forward.1} parent=0 // pred_check
    _
  $region23: #{model_forward.1} parent=0 // pred_check_branch
    %22 = sbr.rel (0) target = $region25
  $region24: #{model_forward.1} parent=0 // pred_region
    _
  $region25: #{model_forward.1} parent=0 // pred_fallthru
    _
  %v23 = vld [vmem:[%s1] sm:$0xff]
  %v24 = vld [vmem:[%s1 + $0x8] sm:$0xff]
  %v25 = vld [vmem:[%s0] sm:$0xff]
  %v26 = vld [vmem:[%s0 + $0x8] sm:$0xff]
  %v27 = vld [vmem:[%s0 + $0x10] sm:$0xff]
  %v28 = vld [vmem:[%s0 + $0x18] sm:$0xff]
  %v29 = vld [vmem:[%s0 + $0x20] sm:$0xff]
  %vm30 = vcmask 326656
  %v32 = vsel %vm30, %v23, 0
  %v35 = vsel %vm30, %v24, 0
  %37 = vmatprep.subr.mxu0 0.0
  %38 = vmatpush1.msra.mxu0 %v25
  %39 = vmatprep.subr.mxu0 0.0
  %40 = vmatpush1.msra.mxu0 %v26
  %41 = vmatprep.subr.mxu0 0.0
  %42 = vmatpush1.msra.mxu0 %v27
  %43 = vmatprep.subr.mxu0 0.0
  %44 = vmatpush1.msra.mxu0 %v28
  %45 = vmatprep.subr.mxu0 0.0
  %46 = vmatpush1.msra.mxu0 %v29
  %47 = vmatprep.subr.mxu0 0.0
  %48 = vmatpush1.msra.mxu0 0.0
  %49 = vmatprep.subr.mxu0 0.0
  %50 = vmatpush1.msra.mxu0 0.0
  %51 = vmatprep.subr.mxu0 0.0
  %52 = vmatpush1.msra.mxu0 0.0
  %53 = vmatprep.subr.mxu0 0.0
  %54 = vmatpush1.msra.mxu0 0.0
  %55 = vmatprep.subr.mxu0 0.0
  %56 = vmatpush1.msra.mxu0 0.0
  %57 = vmatprep.subr.mxu0 0.0
  %58 = vmatpush1.msra.mxu0 0.0
  %59 = vmatprep.subr.mxu0 0.0
  %60 = vmatpush1.msra.mxu0 0.0
  %61 = vmatprep.subr.mxu0 0.0
  %62 = vmatpush1.msra.mxu0 0.0
  %63 = vmatprep.subr.mxu0 0.0
  %64 = vmatpush1.msra.mxu0 0.0
  %65 = vmatprep.subr.mxu0 0.0
  %66 = vmatpush1.msra.mxu0 0.0
  %67 = vmatprep.subr.mxu0 0.0
  %68 = vmatpush1.msra.mxu0 0.0
  %69 = vmatprep.subr.mxu0 0.0
  %70 = vmatpush1.msra.mxu0 0.0
  %71 = vmatprep.subr.mxu0 0.0
  %72 = vmatpush1.msra.mxu0 0.0
  %73 = vmatprep.subr.mxu0 0.0
  %74 = vmatpush1.msra.mxu0 0.0
  %75 = vmatprep.subr.mxu0 0.0
  %76 = vmatpush1.msra.mxu0 0.0
  %77 = vmatprep.subr.mxu0 0.0
  %78 = vmatpush1.msra.mxu0 0.0
  %79 = vmatprep.subr.mxu0 0.0
  %80 = vmatpush1.msra.mxu0 0.0
  %81 = vmatprep.subr.mxu0 0.0
  %82 = vmatpush1.msra.mxu0 0.0
  %83 = vmatprep.subr.mxu0 0.0
  %84 = vmatpush1.msra.mxu0 0.0
  %85 = vmatprep.subr.mxu0 0.0
  %86 = vmatpush1.msra.mxu0 0.0
  %87 = vmatprep.subr.mxu0 0.0
  %88 = vmatpush1.msra.mxu0 0.0
  %89 = vmatprep.subr.mxu0 0.0
  %90 = vmatpush1.msra.mxu0 0.0
  %91 = vmatprep.subr.mxu0 0.0
  %92 = vmatpush1.msra.mxu0 0.0
  %93 = vmatprep.subr.mxu0 0.0
  %94 = vmatpush1.msra.mxu0 0.0
  %95 = vmatprep.subr.mxu0 0.0
  %96 = vmatpush1.msra.mxu0 0.0
  %97 = vmatprep.subr.mxu0 0.0
  %98 = vmatpush1.msra.mxu0 0.0
  %99 = vmatprep.subr.mxu0 0.0
  %100 = vmatpush1.msra.mxu0 0.0
  %101 = vmatprep.mubr.f32.mxu0 0.0
  %102 = vmatmul.mubr.f32.gmra.mrb[0].mxu0 %v32
  %v103 = vpop.f32.mrb[0].mxu0
  %v104 = vadd.f32 0.0, %v103
  %v105 = vpop.f32.mrb[0].mxu0
  %106 = vmatprep.mubr.f32.mxu0 0.0
  %107 = vmatmul.mubr.f32.gmra.mrb[0].mxu0 %v35
  %v108 = vpop.f32.mrb[0].mxu0
  %v109 = vadd.f32 0.0, %v108
  %v110 = vpop.f32.mrb[0].mxu0
  %111 = vdwg.mxu0
  %v112 = vtanh.pop %v104
  %v113 = vtanh.pop %v109
  %v114 = vld [vmem:[%s2] sm:$0xff]
  %v115 = vld [vmem:[%s2 + $0x8] sm:$0xff]
  %v116 = vld [vmem:[%s2 + $0x10] sm:$0xff]
  %v117 = vld [vmem:[%s2 + $0x18] sm:$0xff]
  %vm118 = vcmask 130048
  %v120 = vsel %vm118, %v114, 0
  %v123 = vsel %vm118, %v115, 0
  %v126 = vsel %vm118, %v116, 0
  %v129 = vsel %vm118, %v117, 0
  %131 = vmatprep.subr.mxu0 0.0
  %132 = vmatpush1.msra.mxu0 %v112
  %133 = vmatprep.subr.mxu0 0.0
  %134 = vmatpush1.msra.mxu0 %v113
  %135 = vmatprep.subr.mxu0 0.0
  %136 = vmatpush1.msra.mxu0 0.0
  %137 = vmatprep.subr.mxu0 0.0
  %138 = vmatpush1.msra.mxu0 0.0
  %139 = vmatprep.subr.mxu0 0.0
  %140 = vmatpush1.msra.mxu0 0.0
  %141 = vmatprep.subr.mxu0 0.0
  %142 = vmatpush1.msra.mxu0 0.0
  %143 = vmatprep.subr.mxu0 0.0
  %144 = vmatpush1.msra.mxu0 0.0
  %145 = vmatprep.subr.mxu0 0.0
  %146 = vmatpush1.msra.mxu0 0.0
  %147 = vmatprep.subr.mxu0 0.0
  %148 = vmatpush1.msra.mxu0 0.0
  %149 = vmatprep.subr.mxu0 0.0
  %150 = vmatpush1.msra.mxu0 0.0
  %151 = vmatprep.subr.mxu0 0.0
  %152 = vmatpush1.msra.mxu0 0.0
  %153 = vmatprep.subr.mxu0 0.0
  %154 = vmatpush1.msra.mxu0 0.0
  %155 = vmatprep.subr.mxu0 0.0
  %156 = vmatpush1.msra.mxu0 0.0
  %157 = vmatprep.subr.mxu0 0.0
  %158 = vmatpush1.msra.mxu0 0.0
  %159 = vmatprep.subr.mxu0 0.0
  %160 = vmatpush1.msra.mxu0 0.0
  %161 = vmatprep.subr.mxu0 0.0
  %162 = vmatpush1.msra.mxu0 0.0
  %163 = vmatprep.subr.mxu0 0.0
  %164 = vmatpush1.msra.mxu0 0.0
  %165 = vmatprep.subr.mxu0 0.0
  %166 = vmatpush1.msra.mxu0 0.0
  %167 = vmatprep.subr.mxu0 0.0
  %168 = vmatpush1.msra.mxu0 0.0
  %169 = vmatprep.subr.mxu0 0.0
  %170 = vmatpush1.msra.mxu0 0.0
  %171 = vmatprep.subr.mxu0 0.0
  %172 = vmatpush1.msra.mxu0 0.0
  %173 = vmatprep.subr.mxu0 0.0
  %174 = vmatpush1.msra.mxu0 0.0
  %175 = vmatprep.subr.mxu0 0.0
  %176 = vmatpush1.msra.mxu0 0.0
  %177 = vmatprep.subr.mxu0 0.0
  %178 = vmatpush1.msra.mxu0 0.0
  %179 = vmatprep.subr.mxu0 0.0
  %180 = vmatpush1.msra.mxu0 0.0
  %181 = vmatprep.subr.mxu0 0.0
  %182 = vmatpush1.msra.mxu0 0.0
  %183 = vmatprep.subr.mxu0 0.0
  %184 = vmatpush1.msra.mxu0 0.0
  %185 = vmatprep.subr.mxu0 0.0
  %186 = vmatpush1.msra.mxu0 0.0
  %187 = vmatprep.subr.mxu0 0.0
  %188 = vmatpush1.msra.mxu0 0.0
  %189 = vmatprep.subr.mxu0 0.0
  %190 = vmatpush1.msra.mxu0 0.0
  %191 = vmatprep.subr.mxu0 0.0
  %192 = vmatpush1.msra.mxu0 0.0
  %193 = vmatprep.subr.mxu0 0.0
  %194 = vmatpush1.msra.mxu0 0.0
  %195 = vmatprep.mubr.f32.mxu0 0.0
  %196 = vmatmul.mubr.f32.gmra.mrb[0].mxu0 %v120
  %v197 = vpop.f32.mrb[0].mxu0
  %v198 = vadd.f32 0.0, %v197
  %v199 = vpop.f32.mrb[0].mxu0
  %200 = vmatprep.mubr.f32.mxu0 0.0
  %201 = vmatmul.mubr.f32.gmra.mrb[0].mxu0 %v123
  %v202 = vpop.f32.mrb[0].mxu0
  %v203 = vadd.f32 0.0, %v202
  %v204 = vpop.f32.mrb[0].mxu0
  %205 = vmatprep.mubr.f32.mxu0 0.0
  %206 = vmatmul.mubr.f32.gmra.mrb[0].mxu0 %v126
  %v207 = vpop.f32.mrb[0].mxu0
  %v208 = vadd.f32 0.0, %v207
  %v209 = vpop.f32.mrb[0].mxu0
  %210 = vmatprep.mubr.f32.mxu0 0.0
  %211 = vmatmul.mubr.f32.gmra.mrb[0].mxu0 %v129
  %v212 = vpop.f32.mrb[0].mxu0
  %v213 = vadd.f32 0.0, %v212
  %v214 = vpop.f32.mrb[0].mxu0
  %215 = vdwg.mxu0
  %v216 = vmax.f32 %v198, 0.0
  %v217 = vmax.f32 %v203, 0.0
  %v218 = vmax.f32 %v208, 0.0
  %v219 = vmax.f32 %v213, 0.0
  %220 = vrot.lane.b32.xlu0 %v216, 22
  %v221 = vpop.permute.xlu0 %220
  %222 = vrot.lane.b32.xlu0 %v217, 22
  %v223 = vpop.permute.xlu0 %222
  %224 = vrot.lane.b32.xlu0 %v218, 22
  %v225 = vpop.permute.xlu0 %224
  %226 = vrot.lane.b32.xlu0 %v219, 22
  %v227 = vpop.permute.xlu0 %226
  %v228 = vld [vmem:[%s5] sm:$0x1]
  %v230 = vlaneseq
  %v231 = vshrl.u32 %v230, 7
  %v232 = vsub.s32 0, %v231
  %v233 = vrot.slane %v228, %v232
  %v235 = vmul.f32 %v233, %v221
  %v236 = vmul.f32 %v233, %v223
  %v237 = vmul.f32 %v233, %v225
  %v238 = vmul.f32 %v233, %v227
  %239 = vrot.lane.b32.xlu0 %v216, 18
  %v240 = vpop.permute.xlu0 %239
  %241 = vrot.lane.b32.xlu0 %v217, 18
  %v242 = vpop.permute.xlu0 %241
  %243 = vrot.lane.b32.xlu0 %v218, 18
  %v244 = vpop.permute.xlu0 %243
  %245 = vrot.lane.b32.xlu0 %v219, 18
  %v246 = vpop.permute.xlu0 %245
  %s247 = scalar_lea.vmem %s5, 1
  %v248 = vld [vmem:[%s247] sm:$0x1]
  %v250 = vlaneseq
  %v251 = vshrl.u32 %v250, 7
  %v252 = vsub.s32 0, %v251
  %v253 = vrot.slane %v248, %v252
  %v255 = vmul.f32 %v253, %v240
  %v256 = vmul.f32 %v253, %v242
  %v257 = vmul.f32 %v253, %v244
  %v258 = vmul.f32 %v253, %v246
  %259 = vrot.lane.b32.xlu0 %v216, 110
  %v260 = vpop.permute.xlu0 %259
  %261 = vrot.lane.b32.xlu0 %v217, 110
  %v262 = vpop.permute.xlu0 %261
  %263 = vrot.lane.b32.xlu0 %v218, 110
  %v264 = vpop.permute.xlu0 %263
  %265 = vrot.lane.b32.xlu0 %v219, 110
  %v266 = vpop.permute.xlu0 %265
  %s267 = scalar_lea.vmem %s5, 2
  %v268 = vld [vmem:[%s267] sm:$0x1]
  %v270 = vlaneseq
  %v271 = vshrl.u32 %v270, 7
  %v272 = vsub.s32 0, %v271
  %v273 = vrot.slane %v268, %v272
  %v275 = vmul.f32 %v273, %v260
  %v276 = vmul.f32 %v273, %v262
  %v277 = vmul.f32 %v273, %v264
  %v278 = vmul.f32 %v273, %v266
  %279 = vrot.lane.b32.xlu0 %v216, 106
  %v280 = vpop.permute.xlu0 %279
  %281 = vrot.lane.b32.xlu0 %v217, 106
  %v282 = vpop.permute.xlu0 %281
  %283 = vrot.lane.b32.xlu0 %v218, 106
  %v284 = vpop.permute.xlu0 %283
  %285 = vrot.lane.b32.xlu0 %v219, 106
  %v286 = vpop.permute.xlu0 %285
  %s287 = scalar_lea.vmem %s5, 3
  %v288 = vld [vmem:[%s287] sm:$0x1]
  %v290 = vlaneseq
  %v291 = vshrl.u32 %v290, 7
  %v292 = vsub.s32 0, %v291
  %v293 = vrot.slane %v288, %v292
  %v295 = vmul.f32 %v293, %v280
  %v296 = vmul.f32 %v293, %v282
  %v297 = vmul.f32 %v293, %v284
  %v298 = vmul.f32 %v293, %v286
  %v299 = vld [vmem:[%s3] sm:$0xff]
  %v300 = vld [vmem:[%s3 + $0x8] sm:$0xff]
  %v301 = vld [vmem:[%s3 + $0x10] sm:$0xff]
  %v302 = vld [vmem:[%s3 + $0x18] sm:$0xff]
  %v303 = vld [vmem:[%s3 + $0x20] sm:$0xff]
  %v304 = vld [vmem:[%s3 + $0x28] sm:$0xff]
  %v305 = vld [vmem:[%s3 + $0x30] sm:$0xff]
  %v306 = vld [vmem:[%s3 + $0x38] sm:$0xff]
  %v307 = vld [vmem:[%s4] sm:$0xff]
  %v308 = vld [vmem:[%s4 + $0x8] sm:$0xff]
  %v309 = vld [vmem:[%s4 + $0x10] sm:$0xff]
  %v310 = vld [vmem:[%s4 + $0x18] sm:$0xff]
  %v311 = vld [vmem:[%s4 + $0x20] sm:$0xff]
  %v312 = vld [vmem:[%s4 + $0x28] sm:$0xff]
  %v313 = vld [vmem:[%s4 + $0x30] sm:$0xff]
  %v314 = vld [vmem:[%s4 + $0x38] sm:$0xff]
  %316 = vset.pattern.permute.xlu0 0
  %317 = vperm.xlu0 %316, %v307
  %v318 = vpop.permute.xlu0 %317
  %321 = vset.pattern.permute.xlu0 0
  %322 = vperm.xlu0 %321, %v308
  %v323 = vpop.permute.xlu0 %322
  %326 = vset.pattern.permute.xlu0 0
  %327 = vperm.xlu0 %326, %v309
  %v328 = vpop.permute.xlu0 %327
  %331 = vset.pattern.permute.xlu0 0
  %332 = vperm.xlu0 %331, %v310
  %v333 = vpop.permute.xlu0 %332
  %336 = vset.pattern.permute.xlu0 0
  %337 = vperm.xlu0 %336, %v311
  %v338 = vpop.permute.xlu0 %337
  %341 = vset.pattern.permute.xlu0 0
  %342 = vperm.xlu0 %341, %v312
  %v343 = vpop.permute.xlu0 %342
  %346 = vset.pattern.permute.xlu0 0
  %347 = vperm.xlu0 %346, %v313
  %v348 = vpop.permute.xlu0 %347
  %351 = vset.pattern.permute.xlu0 0
  %352 = vperm.xlu0 %351, %v314
  %v353 = vpop.permute.xlu0 %352
  %355 = vmatprep.subr.mxu0 0.0
  %356 = vmatpush1.msra.mxu0 %v235
  %357 = vmatprep.subr.mxu0 0.0
  %358 = vmatpush1.msra.mxu0 %v236
  %359 = vmatprep.subr.mxu0 0.0
  %360 = vmatpush1.msra.mxu0 %v237
  %361 = vmatprep.subr.mxu0 0.0
  %362 = vmatpush1.msra.mxu0 %v238
  %363 = vmatprep.subr.mxu0 0.0
  %364 = vmatpush1.msra.mxu0 %v255
  %365 = vmatprep.subr.mxu0 0.0
  %366 = vmatpush1.msra.mxu0 %v256
  %367 = vmatprep.subr.mxu0 0.0
  %368 = vmatpush1.msra.mxu0 %v257
  %369 = vmatprep.subr.mxu0 0.0
  %370 = vmatpush1.msra.mxu0 %v258
  %371 = vmatprep.subr.mxu0 0.0
  %372 = vmatpush1.msra.mxu0 %v275
  %373 = vmatprep.subr.mxu0 0.0
  %374 = vmatpush1.msra.mxu0 %v276
  %375 = vmatprep.subr.mxu0 0.0
  %376 = vmatpush1.msra.mxu0 %v277
  %377 = vmatprep.subr.mxu0 0.0
  %378 = vmatpush1.msra.mxu0 %v278
  %379 = vmatprep.subr.mxu0 0.0
  %380 = vmatpush1.msra.mxu0 %v295
  %381 = vmatprep.subr.mxu0 0.0
  %382 = vmatpush1.msra.mxu0 %v296
  %383 = vmatprep.subr.mxu0 0.0
  %384 = vmatpush1.msra.mxu0 %v297
  %385 = vmatprep.subr.mxu0 0.0
  %386 = vmatpush1.msra.mxu0 %v298
  %387 = vmatprep.subr.mxu0 0.0
  %388 = vmatpush1.msra.mxu0 0.0
  %389 = vmatprep.subr.mxu0 0.0
  %390 = vmatpush1.msra.mxu0 0.0
  %391 = vmatprep.subr.mxu0 0.0
  %392 = vmatpush1.msra.mxu0 0.0
  %393 = vmatprep.subr.mxu0 0.0
  %394 = vmatpush1.msra.mxu0 0.0
  %395 = vmatprep.subr.mxu0 0.0
  %396 = vmatpush1.msra.mxu0 0.0
  %397 = vmatprep.subr.mxu0 0.0
  %398 = vmatpush1.msra.mxu0 0.0
  %399 = vmatprep.subr.mxu0 0.0
  %400 = vmatpush1.msra.mxu0 0.0
  %401 = vmatprep.subr.mxu0 0.0
  %402 = vmatpush1.msra.mxu0 0.0
  %403 = vmatprep.subr.mxu0 0.0
  %404 = vmatpush1.msra.mxu0 0.0
  %405 = vmatprep.subr.mxu0 0.0
  %406 = vmatpush1.msra.mxu0 0.0
  %407 = vmatprep.subr.mxu0 0.0
  %408 = vmatpush1.msra.mxu0 0.0
  %409 = vmatprep.subr.mxu0 0.0
  %410 = vmatpush1.msra.mxu0 0.0
  %411 = vmatprep.subr.mxu0 0.0
  %412 = vmatpush1.msra.mxu0 0.0
  %413 = vmatprep.subr.mxu0 0.0
  %414 = vmatpush1.msra.mxu0 0.0
  %415 = vmatprep.subr.mxu0 0.0
  %416 = vmatpush1.msra.mxu0 0.0
  %417 = vmatprep.subr.mxu0 0.0
  %418 = vmatpush1.msra.mxu0 0.0
  %419 = vmatprep.mubr.f32.mxu0 0.0
  %420 = vmatmul.mubr.f32.gmra.mrb[0].mxu0 %v299
  %v421 = vpop.f32.mrb[0].mxu0
  %v422 = vadd.f32 %v318, %v421
  %v423 = vpop.f32.mrb[0].mxu0
  %424 = vmatprep.mubr.f32.mxu0 0.0
  %425 = vmatmul.mubr.f32.gmra.mrb[0].mxu0 %v300
  %v426 = vpop.f32.mrb[0].mxu0
  %v427 = vadd.f32 %v323, %v426
  %v428 = vpop.f32.mrb[0].mxu0
  %429 = vmatprep.mubr.f32.mxu0 0.0
  %430 = vmatmul.mubr.f32.gmra.mrb[0].mxu0 %v301
  %v431 = vpop.f32.mrb[0].mxu0
  %v432 = vadd.f32 %v328, %v431
  %v433 = vpop.f32.mrb[0].mxu0
  %434 = vmatprep.mubr.f32.mxu0 0.0
  %435 = vmatmul.mubr.f32.gmra.mrb[0].mxu0 %v302
  %v436 = vpop.f32.mrb[0].mxu0
  %v437 = vadd.f32 %v333, %v436
  %v438 = vpop.f32.mrb[0].mxu0
  %439 = vmatprep.mubr.f32.mxu0 0.0
  %440 = vmatmul.mubr.f32.gmra.mrb[0].mxu0 %v303
  %v441 = vpop.f32.mrb[0].mxu0
  %v442 = vadd.f32 %v338, %v441
  %v443 = vpop.f32.mrb[0].mxu0
  %444 = vmatprep.mubr.f32.mxu0 0.0
  %445 = vmatmul.mubr.f32.gmra.mrb[0].mxu0 %v304
  %v446 = vpop.f32.mrb[0].mxu0
  %v447 = vadd.f32 %v343, %v446
  %v448 = vpop.f32.mrb[0].mxu0
  %449 = vmatprep.mubr.f32.mxu0 0.0
  %450 = vmatmul.mubr.f32.gmra.mrb[0].mxu0 %v305
  %v451 = vpop.f32.mrb[0].mxu0
  %v452 = vadd.f32 %v348, %v451
  %v453 = vpop.f32.mrb[0].mxu0
  %454 = vmatprep.mubr.f32.mxu0 0.0
  %455 = vmatmul.mubr.f32.gmra.mrb[0].mxu0 %v306
  %v456 = vpop.f32.mrb[0].mxu0
  %v457 = vadd.f32 %v353, %v456
  %v458 = vpop.f32.mrb[0].mxu0
  %459 = vdwg.mxu0
  %v460 = vmax.f32 %v422, 0.0
  %v461 = vmax.f32 %v427, 0.0
  %v462 = vmax.f32 %v432, 0.0
  %v463 = vmax.f32 %v437, 0.0
  %v464 = vmax.f32 %v442, 0.0
  %v465 = vmax.f32 %v447, 0.0
  %v466 = vmax.f32 %v452, 0.0
  %v467 = vmax.f32 %v457, 0.0
  %468 = vst [vmem:[%s6] sm:$0xff] %v460
  %469 = vst [vmem:[%s6 + $0x8] sm:$0xff] %v461
  %470 = vst [vmem:[%s6 + $0x10] sm:$0xff] %v462
  %471 = vst [vmem:[%s6 + $0x18] sm:$0xff] %v463
  %472 = vst [vmem:[%s6 + $0x20] sm:$0xff] %v464
  %473 = vst [vmem:[%s6 + $0x28] sm:$0xff] %v465
  %474 = vst [vmem:[%s6 + $0x30] sm:$0xff] %v466
  %475 = vst [vmem:[%s6 + $0x38] sm:$0xff] %v467
  // Predicated region
  $region26: #{model_forward.1} parent=0 // pred_check
    _
  $region27: #{model_forward.1} parent=0 // pred_check_branch
    %477 = sbr.rel (0) target = $region29
  $region28: #{model_forward.1} parent=0 // pred_region
    _
  $region29: #{model_forward.1} parent=0 // pred_fallthru
    _
  // Predicated region
  $region30: #{model_forward.1} parent=0 // pred_check
    _
  $region31: #{model_forward.1} parent=0 // pred_check_branch
    %479 = sbr.rel (0) target = $region33
  $region32: #{model_forward.1} parent=0 // pred_region
    _
  $region33: #{model_forward.1} parent=0 // pred_fallthru
    _

</llo_original>
